<compile_context>
chip_gen: v7x
topology: tpu7x:2x2x1
jax: 0.10.0
libtpu: 0.0.40
codegen_flags: <defaults>
</compile_context>

<pallas_src>
import functools

import jax
import jax.numpy as jnp
from jax.experimental import pallas as pl
from jax.experimental.pallas import tpu as pltpu


def _round_up(a: int, b: int) -> int:
    return ((a + b - 1) // b) * b


# --------------------------------------------------------------------------
# Kernel
# --------------------------------------------------------------------------
def swiglu_kernel(x_ref, w12_ref, b12_ref, w3_ref, b3_ref, o_ref, acc_ref):
    k = pl.program_id(1)

    @pl.when(k == 0)
    def _():
        acc_ref[...] = jnp.zeros_like(acc_ref)

    th = w3_ref.shape[0]          # static H-tile width (multiple of 128)
    x = x_ref[...]                # (tm, D), matmul dtype (bf16)

    # Fused gate/up projection: single MXU pass over the (D, 2*th) tile,
    # f32 accumulation, f32 bias add.
    h12 = jnp.dot(x, w12_ref[...], preferred_element_type=jnp.float32) + b12_ref[...]
    h1 = h12[:, :th]              # linear1 (lane-aligned static slice)
    h2 = h12[:, th:]              # linear2 (gate pre-activation)

    gate = h2 * jax.nn.sigmoid(h2)            # SiLU in f32 (sigmoid -> EUP)
    h = (h1 * gate).astype(w3_ref.dtype)

    # Partial contribution of this H-tile to the output, f32 accumulator.
    acc_ref[...] += jnp.dot(h, w3_ref[...], preferred_element_type=jnp.float32)

    @pl.when(k == pl.num_programs(1) - 1)
    def _():
        o_ref[...] = (acc_ref[...] + b3_ref[...]).astype(o_ref.dtype)


# --------------------------------------------------------------------------
# Generation-aware tile planning
# --------------------------------------------------------------------------
def _vmem_capacity_bytes() -> int:
    try:
        cap = getattr(pltpu.get_tpu_info(), "vmem_capacity_bytes", None)
        if cap:
            return int(cap)
    except Exception:
        pass
    return 64 * 1024 * 1024   # conservative fallback (v7x-sized)


def plan_tiles(M, D, H, *, matmul_dtype=jnp.bfloat16, out_dtype=jnp.float32):
    """Pick (tm, th, vmem_limit_bytes) against this chip's VMEM capacity."""
    vmem_cap = _vmem_capacity_bytes()
    budget = int(vmem_cap * 0.75)          # ~96 MiB on v5e/v6e, ~48 MiB on v7x
    mm_bytes = jnp.dtype(matmul_dtype).itemsize
    o_bytes = jnp.dtype(out_dtype).itemsize

    H128 = _round_up(H, 128)

    def weight_bytes(th_):
        # fused [W1|W2] tile (D, 2*th) + W3 tile (th, D), double-buffered.
        return 2 * (2 * th_ + th_) * D * mm_bytes

    # Largest th (multiple of 128, <= 1024) whose weight tiles fit ~55% of budget.
    th = min(H128, 1024)
    while th > 128 and weight_bytes(th) > 0.55 * budget:
        th -= 128

    # Remaining VMEM goes to x / out (double-buffered) and the f32 accumulator.
    per_row = D * (2 * mm_bytes + 2 * o_bytes + 4)
    avail = budget - weight_bytes(th) - (1 << 20)     # ~1 MiB slack (biases etc.)
    tm_cap = max(16, (int(avail) // per_row // 16) * 16)

    if M <= 512:
        # Single M tile: every weight byte is streamed from HBM exactly once.
        tm = min(_round_up(M, 16), tm_cap)
    else:
        # Large M: big tiles (toward 768) with minimal M padding.
        tm0 = min(768, tm_cap)
        n_steps = -(-M // tm0)
        tm = min(_round_up(-(-M // n_steps), 16), tm_cap)

    return tm, th, budget


# --------------------------------------------------------------------------
# One-time weight preparation (hoisted out of the forward call)
# --------------------------------------------------------------------------
def prepare_params(w1, b1, w2, b2, w3, b3, *, th, matmul_dtype=jnp.bfloat16):
    """Pad H to a multiple of th, fuse [W1|W2] per H-tile, cast to MXU dtype."""
    D, H = w1.shape
    H_pad = _round_up(H, th)
    nH = H_pad // th
    ph = H_pad - H

    w1p = jnp.pad(w1, ((0, 0), (0, ph))).reshape(D, nH, th)
    w2p = jnp.pad(w2, ((0, 0), (0, ph))).reshape(D, nH, th)
    w12 = jnp.concatenate([w1p, w2p], axis=2).reshape(D, nH * 2 * th)
    w12 = w12.astype(matmul_dtype)

    b1p = jnp.pad(b1, ((0, 0), (0, ph))).reshape(1, nH, th)
    b2p = jnp.pad(b2, ((0, 0), (0, ph))).reshape(1, nH, th)
    b12 = jnp.concatenate([b1p, b2p], axis=2).reshape(1, nH * 2 * th)
    b12 = b12.astype(jnp.float32)

    w3p = jnp.pad(w3, ((0, ph), (0, 0))).astype(matmul_dtype)
    b3p = b3.astype(jnp.float32)
    return w12, b12, w3p, b3p


# --------------------------------------------------------------------------
# Forward pass
# --------------------------------------------------------------------------
def swiglu_ffn(x, w12, b12, w3p, b3p, *, tm, th, vmem_limit_bytes):
    """x: (B, S, D). w12: (D, nH*2*th) fused. w3p: (H_pad, D). Biases f32."""
    B, S, D = x.shape
    M = B * S
    H_pad = w3p.shape[0]
    assert w3p.shape[1] == D and H_pad % th == 0
    assert tm % 16 == 0 and th % 128 == 0

    M_pad = _round_up(M, tm)
    x2 = x.reshape(M, D)
    if M_pad != M:
        x2 = jnp.pad(x2, ((0, M_pad - M), (0, 0)))
    x2 = x2.astype(w12.dtype)

    grid = (M_pad // tm, H_pad // th)

    out = pl.pallas_call(
        swiglu_kernel,
        out_shape=jax.ShapeDtypeStruct((M_pad, D), x.dtype),
        grid_spec=pltpu.PrefetchScalarGridSpec(
            num_scalar_prefetch=0,
            grid=grid,
            in_specs=[
                pl.BlockSpec((tm, D),     lambda i, k: (i, 0)),   # x tile
                pl.BlockSpec((D, 2 * th), lambda i, k: (0, k)),   # [W1|W2] tile k
                pl.BlockSpec((1, 2 * th), lambda i, k: (0, k)),   # [b1|b2] tile k
                pl.BlockSpec((th, D),     lambda i, k: (k, 0)),   # W3 tile k
                pl.BlockSpec((1, D),      lambda i, k: (0, 0)),   # b3
            ],
            out_specs=pl.BlockSpec((tm, D), lambda i, k: (i, 0)),
            scratch_shapes=[pltpu.VMEM((tm, D), jnp.float32)],
        ),
        compiler_params=pltpu.CompilerParams(
            dimension_semantics=("parallel", "arbitrary"),
            vmem_limit_bytes=vmem_limit_bytes,
        ),
    )(x2, w12, b12, w3p, b3p)

    return out[:M, :].reshape(B, S, D)


# --------------------------------------------------------------------------
# Parameter init + references
# --------------------------------------------------------------------------
def init_params(key, d_model):
    """Synthetic init mirroring nn.Linear shapes (weights stored transposed)."""
    d_intermed = int(8 / 3 * d_model)           # matches PyTorch int(8/3*d_model)
    k1, k2, k3, k4, k5, k6 = jax.random.split(key, 6)
    s_in = 1.0 / jnp.sqrt(d_model)
    s_hid = 1.0 / jnp.sqrt(d_intermed)
    w1 = jax.random.uniform(k1, (d_model, d_intermed), jnp.float32, -s_in, s_in)
    b1 = jax.random.uniform(k2, (1, d_intermed), jnp.float32, -s_in, s_in)
    w2 = jax.random.uniform(k3, (d_model, d_intermed), jnp.float32, -s_in, s_in)
    b2 = jax.random.uniform(k4, (1, d_intermed), jnp.float32, -s_in, s_in)
    w3 = jax.random.uniform(k5, (d_intermed, d_model), jnp.float32, -s_hid, s_hid)
    b3 = jax.random.uniform(k6, (1, d_model), jnp.float32, -s_hid, s_hid)
    return w1, b1, w2, b2, w3, b3


def reference_f32(x, w1, b1, w2, b2, w3, b3):
    """Exact f32 forward (matches the PyTorch module numerics)."""
    gate = jax.nn.silu(x @ w2 + b2[0])
    h = (x @ w1 + b1[0]) * gate
    return h @ w3 + b3[0]


def reference_bf16(x, w1, b1, w2, b2, w3, b3):
    """Same bf16 matmul-input / f32-accumulate strategy as the kernel."""
    xb = x.astype(jnp.bfloat16)
    w1b, w2b, w3b = (w.astype(jnp.bfloat16) for w in (w1, w2, w3))
    h1 = jnp.dot(xb, w1b, preferred_element_type=jnp.float32) + b1[0]
    h2 = jnp.dot(xb, w2b, preferred_element_type=jnp.float32) + b2[0]
    h = (h1 * (h2 * jax.nn.sigmoid(h2))).astype(jnp.bfloat16)
    out = jnp.dot(h, w3b, preferred_element_type=jnp.float32) + b3[0]
    return out.astype(x.dtype)


# --------------------------------------------------------------------------
if __name__ == "__main__":
    key = jax.random.PRNGKey(0)
    kx, kp = jax.random.split(key)

    batch, seq_len, d_model = 2, 8, 48        # d_intermed = int(8/3*48) = 128
    x = jax.random.normal(kx, (batch, seq_len, d_model), jnp.float32)
    w1, b1, w2, b2, w3, b3 = init_params(kp, d_model)

    M, D, H = batch * seq_len, d_model, w1.shape[1]
    tm, th, vmem_limit = plan_tiles(M, D, H)

    # Weight prep (pad + fuse + bf16 cast) is done ONCE, outside the forward.
    w12, b12, w3p, b3p = prepare_params(w1, b1, w2, b2, w3, b3, th=th)

    fwd = jax.jit(functools.partial(
        swiglu_ffn, tm=tm, th=th, vmem_limit_bytes=vmem_limit))
    out = jax.block_until_ready(fwd(x, w12, b12, w3p, b3p))
    assert out.shape == (batch, seq_len, d_model)

    # Tight check vs a reference using identical bf16 matmul-input casts.
    ref_b = reference_bf16(x, w1, b1, w2, b2, w3, b3)
    assert jnp.allclose(out, ref_b, atol=1e-3, rtol=1e-3), \
        f"max|diff| vs bf16 ref = {float(jnp.max(jnp.abs(out - ref_b)))}"

    # Loose sanity check vs the exact f32 PyTorch-equivalent forward.
    ref_f = reference_f32(x, w1, b1, w2, b2, w3, b3)
    assert jnp.allclose(out, ref_f, atol=6e-2, rtol=6e-2), \
        f"max|diff| vs f32 ref = {float(jnp.max(jnp.abs(out - ref_f)))}"

    print("KERNEL_OK")
</pallas_src>

<mosaic_0001>
module attributes {stable_mosaic.version = 11 : i64} {
  func.func @swiglu_kernel(%arg0: i32, %arg1: i32, %arg2: memref<16x48xbf16, #tpu.memory_space<vmem>>, %arg3: memref<48x256xbf16, #tpu.memory_space<vmem>>, %arg4: memref<1x256xf32, #tpu.memory_space<vmem>>, %arg5: memref<128x48xbf16, #tpu.memory_space<vmem>>, %arg6: memref<1x48xf32, #tpu.memory_space<vmem>>, %arg7: memref<16x48xf32, #tpu.memory_space<vmem>>, %arg8: memref<16x48xf32, #tpu.memory_space<vmem>>) attributes {dimension_semantics = [#tpu.dimension_semantics<parallel>, #tpu.dimension_semantics<arbitrary>], iteration_bounds = array<i64: 1, 1>, scalar_prefetch = 0 : i64, scratch_operands = 1 : i64, tpu.core_type = #tpu.core_type<tc>, window_params = [{transform_indices = @transform_0, window_bounds = array<i64: 16, 48>}, {transform_indices = @transform_1, window_bounds = array<i64: 48, 256>}, {transform_indices = @transform_2, window_bounds = array<i64: 1, 256>}, {transform_indices = @transform_3, window_bounds = array<i64: 128, 48>}, {pipeline_mode = #tpu.pipeline_mode<synchronous>, transform_indices = @transform_4, window_bounds = array<i64: 1, 48>}, {transform_indices = @transform_5, window_bounds = array<i64: 16, 48>}]} {
    %c0_i32 = arith.constant 0 : i32
    %0 = arith.cmpi eq, %arg1, %c0_i32 : i32
    %1 = arith.extui %0 : i1 to i32
    %c0_i32_0 = arith.constant 0 : i32
    %2 = arith.cmpi ne, %1, %c0_i32_0 : i32
    scf.if %2 {
      %cst_16 = arith.constant 0.000000e+00 : f32
      %27 = vector.broadcast %cst_16 : f32 to vector<16x48xf32>
      %c0_17 = arith.constant 0 : index
      %c0_18 = arith.constant 0 : index
      %28 = vector.load %arg8[%c0_17, %c0_18] : memref<16x48xf32, #tpu.memory_space<vmem>>, vector<16x48xf32>
      tpu.vector_store %arg8[%c0_17, %c0_18], %27 {strides = array<i32>} : memref<16x48xf32, #tpu.memory_space<vmem>>, vector<16x48xf32>,
    } else {
    }
    %c0 = arith.constant 0 : index
    %c0_1 = arith.constant 0 : index
    %3 = vector.load %arg2[%c0, %c0_1] : memref<16x48xbf16, #tpu.memory_space<vmem>>, vector<16x48xbf16>
    %c0_2 = arith.constant 0 : index
    %c0_3 = arith.constant 0 : index
    %4 = vector.load %arg3[%c0_2, %c0_3] : memref<48x256xbf16, #tpu.memory_space<vmem>>, vector<48x256xbf16>
    %cst = arith.constant dense<0.000000e+00> : vector<16x256xf32>
    %5 = tpu.matmul %3, %4, %cst {dimension_numbers = #tpu.dot_dimension_numbers<[1], [0], [0], [1], [0, 0, 1, 1], [], []>} : vector<16x48xbf16>, vector<48x256xbf16>, vector<16x256xf32> -> vector<16x256xf32>
    %c0_4 = arith.constant 0 : index
    %c0_5 = arith.constant 0 : index
    %6 = vector.load %arg4[%c0_4, %c0_5] : memref<1x256xf32, #tpu.memory_space<vmem>>, vector<1x256xf32>
    %7 = vector.broadcast %6 : vector<1x256xf32> to vector<16x256xf32>
    %8 = arith.addf %5, %7 : vector<16x256xf32>
    %9 = vector.extract_strided_slice %8 {offsets = [0, 0], sizes = [16, 128], strides = [1, 1]} : vector<16x256xf32> to vector<16x128xf32>
    %10 = vector.extract_strided_slice %8 {offsets = [0, 128], sizes = [16, 128], strides = [1, 1]} : vector<16x256xf32> to vector<16x128xf32>
    %11 = arith.negf %10 : vector<16x128xf32>
    %12 = math.exp %11 : vector<16x128xf32>
    %cst_6 = arith.constant 1.000000e+00 : f32
    %13 = vector.broadcast %cst_6 : f32 to vector<16x128xf32>
    %14 = arith.addf %13, %12 : vector<16x128xf32>
    %15 = arith.divf %13, %14 : vector<16x128xf32>
    %16 = arith.mulf %10, %15 : vector<16x128xf32>
    %17 = arith.mulf %9, %16 : vector<16x128xf32>
    %18 = arith.truncf %17 : vector<16x128xf32> to vector<16x128xbf16>
    %c0_7 = arith.constant 0 : index
    %c0_8 = arith.constant 0 : index
    %19 = vector.load %arg8[%c0_7, %c0_8] : memref<16x48xf32, #tpu.memory_space<vmem>>, vector<16x48xf32>
    %c0_9 = arith.constant 0 : index
    %c0_10 = arith.constant 0 : index
    %20 = vector.load %arg5[%c0_9, %c0_10] : memref<128x48xbf16, #tpu.memory_space<vmem>>, vector<128x48xbf16>
    %cst_11 = arith.constant dense<0.000000e+00> : vector<16x48xf32>
    %21 = tpu.matmul %18, %20, %cst_11 {dimension_numbers = #tpu.dot_dimension_numbers<[1], [0], [0], [1], [0, 0, 1, 1], [], []>} : vector<16x128xbf16>, vector<128x48xbf16>, vector<16x48xf32> -> vector<16x48xf32>
    %22 = arith.addf %19, %21 : vector<16x48xf32>
    %c0_12 = arith.constant 0 : index
    %c0_13 = arith.constant 0 : index
    %23 = vector.load %arg8[%c0_12, %c0_13] : memref<16x48xf32, #tpu.memory_space<vmem>>, vector<16x48xf32>
    tpu.vector_store %arg8[%c0_12, %c0_13], %22 {strides = array<i32>} : memref<16x48xf32, #tpu.memory_space<vmem>>, vector<16x48xf32>,
    %c0_i32_14 = arith.constant 0 : i32
    %24 = arith.cmpi eq, %arg1, %c0_i32_14 : i32
    %25 = arith.extui %24 : i1 to i32
    %c0_i32_15 = arith.constant 0 : i32
    %26 = arith.cmpi ne, %25, %c0_i32_15 : i32
    scf.if %26 {
      %c0_16 = arith.constant 0 : index
      %c0_17 = arith.constant 0 : index
      %27 = vector.load %arg8[%c0_16, %c0_17] : memref<16x48xf32, #tpu.memory_space<vmem>>, vector<16x48xf32>
      %c0_18 = arith.constant 0 : index
      %c0_19 = arith.constant 0 : index
      %28 = vector.load %arg6[%c0_18, %c0_19] : memref<1x48xf32, #tpu.memory_space<vmem>>, vector<1x48xf32>
      %29 = vector.broadcast %28 : vector<1x48xf32> to vector<16x48xf32>
      %30 = arith.addf %27, %29 : vector<16x48xf32>
      %c0_20 = arith.constant 0 : index
      %c0_21 = arith.constant 0 : index
      %31 = vector.load %arg7[%c0_20, %c0_21] : memref<16x48xf32, #tpu.memory_space<vmem>>, vector<16x48xf32>
      tpu.vector_store %arg7[%c0_20, %c0_21], %30 {strides = array<i32>} : memref<16x48xf32, #tpu.memory_space<vmem>>, vector<16x48xf32>,
    } else {
    }
    return
  }
  func.func @transform_0(%arg0: i32, %arg1: i32) -> (i32, i32) {
    %c0_i32 = arith.constant 0 : i32
    %c0_i32_0 = arith.constant 0 : i32
    return %arg0, %c0_i32 : i32, i32
  }
  func.func @transform_1(%arg0: i32, %arg1: i32) -> (i32, i32) {
    %c0_i32 = arith.constant 0 : i32
    %c0_i32_0 = arith.constant 0 : i32
    return %c0_i32, %arg1 : i32, i32
  }
  func.func @transform_2(%arg0: i32, %arg1: i32) -> (i32, i32) {
    %c0_i32 = arith.constant 0 : i32
    %c0_i32_0 = arith.constant 0 : i32
    return %c0_i32, %arg1 : i32, i32
  }
  func.func @transform_3(%arg0: i32, %arg1: i32) -> (i32, i32) {
    %c0_i32 = arith.constant 0 : i32
    %c0_i32_0 = arith.constant 0 : i32
    return %arg1, %c0_i32 : i32, i32
  }
  func.func @transform_4(%arg0: i32, %arg1: i32) -> (i32, i32) {
    %c0_i32 = arith.constant 0 : i32
    %c0_i32_0 = arith.constant 0 : i32
    %c0_i32_1 = arith.constant 0 : i32
    return %c0_i32, %c0_i32_0 : i32, i32
  }
  func.func @transform_5(%arg0: i32, %arg1: i32) -> (i32, i32) {
    %c0_i32 = arith.constant 0 : i32
    %c0_i32_0 = arith.constant 0 : i32
    return %arg0, %c0_i32 : i32, i32
  }
}

</mosaic_0001>

<llo_original>
// kernel: swiglu_ffn.1
$region0: #{swiglu_ffn.1}
  #allocation0 [shape = 'u32[]', space=smem, size = 0x4, offset = 0x4, fixed_abs, tag = 'smem constant byte address 0x4 - core index']
  #allocation1 [shape = 'u32[144,128]{1,0:T(1,128)}', space=vmem, size = 0x12000, scoped, tag = 'internal scratch']
  #allocation2 [shape = 'f32[16,48]{1,0:T(8,128)}', space=vmem, size = 0x2000, scoped, tag = 'scratch operand']
  %s0 = inlined_call_operand.vmem [shape: bf16[16,48], index: 0, kind: input, shape index: {}]
  %s1 = inlined_call_operand.vmem [shape: bf16[48,256], index: 1, kind: input, shape index: {}]
  %s2 = inlined_call_operand.vmem [shape: f32[1,256], index: 2, kind: input, shape index: {}]
  %s3 = inlined_call_operand.vmem [shape: bf16[128,48], index: 3, kind: input, shape index: {}]
  %s4 = inlined_call_operand.vmem [shape: f32[1,48], index: 4, kind: input, shape index: {}]
  %s5 = inlined_call_operand.hbm [shape: f32[16,48], index: 5, kind: output, shape index: {}]
  %s6 = sld [smem:[#allocation0]]
  $region38: #{swiglu_ffn.1} parent=0
    _
  %s8 = ssub.s32 1, %s6
  %s9 = scalar_select 0, %s8, %s6
  $region1: #{swiglu_ffn.1} parent=0
    #allocation3 [shape = 'u8[8192]{0}', space=vmem, size = 0x2000, scoped, tag = 'output window, operand 0, single buffered']
    #allocation4 [shape = 's32[1]{0}', space=sflag, size = 0x4, scoped, tag = 'scoped memory for swiglu_ffn.1']
    %10 = vsyncpa [#allocation4], 0
    // Predicated region
    $region2: #{swiglu_ffn.1} parent=1 // pred_check
      _
    $region3: #{swiglu_ffn.1} parent=1 // pred_check_branch
      %12 = sbr.rel (0) target = $region5
    $region4: #{swiglu_ffn.1} parent=1 // pred_region
      _
    $region5: #{swiglu_ffn.1} parent=1 // pred_fallthru
      _
    // Predicated region
    $region6: #{swiglu_ffn.1} parent=1 // pred_check
      _
    $region7: #{swiglu_ffn.1} parent=1 // pred_check_branch
      %14 = sbr.rel (0) target = $region9
    $region8: #{swiglu_ffn.1} parent=1 // pred_region
      _
    $region9: #{swiglu_ffn.1} parent=1 // pred_fallthru
      _
    // Predicated region
    $region10: #{swiglu_ffn.1} parent=1 // pred_check
      _
    $region11: #{swiglu_ffn.1} parent=1 // pred_check_branch
      %16 = sbr.rel (0) target = $region13
    $region12: #{swiglu_ffn.1} parent=1 // pred_region
      _
    $region13: #{swiglu_ffn.1} parent=1 // pred_fallthru
      _
    // Predicated region
    $region14: #{swiglu_ffn.1} parent=1 // pred_check
      _
    $region15: #{swiglu_ffn.1} parent=1 // pred_check_branch
      %18 = sbr.rel (0) target = $region17
    $region16: #{swiglu_ffn.1} parent=1 // pred_region
      _
    $region17: #{swiglu_ffn.1} parent=1 // pred_fallthru
      _
    // Predicated region
    $region18: #{swiglu_ffn.1} parent=1 // pred_check
      _
    $region19: #{swiglu_ffn.1} parent=1 // pred_check_branch
      %20 = sbr.rel (0) target = $region21
    $region20: #{swiglu_ffn.1} parent=1 // pred_region
      _
    $region21: #{swiglu_ffn.1} parent=1 // pred_fallthru
      _
    %p22 = scmp.eq.s32.totalorder 0, 0
    // Predicated region
    $region22: #{swiglu_ffn.1} parent=1 // pred_check
      %p23 = pneg %p22
    $region23: #{swiglu_ffn.1} parent=1 // pred_check_branch
      %25 = sbr.rel (%p23) target = $region25
    $region24: #{swiglu_ffn.1} parent=1 // pred_region
      %vm26 = vcmask 392192
      %27 = vst.msk [vmem:[#allocation2] sm:$0xff] %vm26, 0.0
      %28 = vst.msk [vmem:[#allocation2 + $0x8] sm:$0xff] %vm26, 0.0
    $region25: #{swiglu_ffn.1} parent=1 // pred_fallthru
      _
    %v29 = vld [vmem:[%s0] sm:$0xf]
    %v30 = vld [vmem:[%s0 + $0x4] sm:$0xf]
    %v31 = vld [vmem:[%s1] sm:$0xff]
    %v32 = vld [vmem:[%s1 + $0x8] sm:$0xff]
    %v33 = vld [vmem:[%s1 + $0x10] sm:$0xff]
    %v34 = vld [vmem:[%s1 + $0x18] sm:$0xff]
    %v35 = vld [vmem:[%s1 + $0x20] sm:$0xff]
    %v36 = vld [vmem:[%s1 + $0x28] sm:$0xff]
    %v37 = vld [vmem:[%s2] sm:$0x3]
    %v39 = vlaneseq
    %v40 = vshrl.u32 %v39, 7
    %v41 = vsub.s32 0, %v40
    %v42 = vrot.slane %v37, %v41
    %v43 = vlaneseq
    %v44 = vshrl.u32 %v43, 7
    %v45 = vsub.s32 1, %v44
    %v46 = vrot.slane %v37, %v45
    %v51 = vunpack.c.l.b16 %v29
    %v52 = vunpack.c.l.b16 %v30
    %v53 = vpack.c.b16 %v52, %v51
    %v60 = vunpack.c.l.b16 %v31
    %v61 = vunpack.c.h.b16 %v31
    %v62 = vunpack.c.l.b16 %v32
    %v63 = vunpack.c.h.b16 %v32
    %v64 = vunpack.c.l.b16 %v33
    %v65 = vunpack.c.h.b16 %v33
    %v66 = vunpack.c.l.b16 %v34
    %v67 = vunpack.c.h.b16 %v34
    %v68 = vunpack.c.l.b16 %v35
    %v69 = vunpack.c.h.b16 %v35
    %v70 = vunpack.c.l.b16 %v36
    %v71 = vunpack.c.h.b16 %v36
    %v72 = vpack.c.b16 %v62, %v60
    %v73 = vpack.c.b16 %v63, %v61
    %v74 = vpack.c.b16 %v66, %v64
    %v75 = vpack.c.b16 %v67, %v65
    %v76 = vpack.c.b16 %v70, %v68
    %v77 = vpack.c.b16 %v71, %v69
    %vm84 = vcmask 392192
    %v86 = vsel %vm84, %v53, 0
    %88 = vmatprep.subr.bf16.mxu0 %v73
    %89 = vmatpush1.bf16.msra.mxu0 %v72
    %90 = vmatprep.subr.bf16.mxu0 %v75
    %91 = vmatpush1.bf16.msra.mxu0 %v74
    %92 = vmatprep.subr.bf16.mxu0 %v77
    %93 = vmatpush1.bf16.msra.mxu0 %v76
    %94 = vmatprep.subr.bf16.mxu0 0
    %95 = vmatpush1.bf16.msra.mxu0 0
    %96 = vmatprep.subr.bf16.mxu0 0
    %97 = vmatpush1.bf16.msra.mxu0 0
    %98 = vmatprep.subr.bf16.mxu0 0
    %99 = vmatpush1.bf16.msra.mxu0 0
    %100 = vmatprep.subr.bf16.mxu0 0
    %101 = vmatpush1.bf16.msra.mxu0 0
    %102 = vmatprep.subr.bf16.mxu0 0
    %103 = vmatpush1.bf16.msra.mxu0 0
    %104 = vmatprep.subr.bf16.mxu0 0
    %105 = vmatpush1.bf16.msra.mxu0 0
    %106 = vmatprep.subr.bf16.mxu0 0
    %107 = vmatpush1.bf16.msra.mxu0 0
    %108 = vmatprep.subr.bf16.mxu0 0
    %109 = vmatpush1.bf16.msra.mxu0 0
    %110 = vmatprep.subr.bf16.mxu0 0
    %111 = vmatpush1.bf16.msra.mxu0 0
    %112 = vmatprep.subr.bf16.mxu0 0
    %113 = vmatpush1.bf16.msra.mxu0 0
    %114 = vmatprep.subr.bf16.mxu0 0
    %115 = vmatpush1.bf16.msra.mxu0 0
    %116 = vmatprep.subr.bf16.mxu0 0
    %117 = vmatpush1.bf16.msra.mxu0 0
    %118 = vmatprep.subr.bf16.mxu0 0
    %119 = vmatpush1.bf16.msra.mxu0 0
    %120 = vmatprep.mubr.bf16.mxu0 0
    %121 = vmatmul.mubr.bf16.gmra.mrb[0].mxu0 %v86
    %v122 = vpop.f32.mrb[0].mxu0
    %v123 = vadd.f32 %v42, %v122
    %v124 = vpop.f32.mrb[0].mxu0
    %v125 = vadd.f32 %v46, %v124
    %v126 = vpop.f32.mrb[0].mxu0
    %v127 = vadd.f32 %v42, %v126
    %v128 = vpop.f32.mrb[0].mxu0
    %v129 = vadd.f32 %v46, %v128
    %130 = vdwg.mxu0
    %v131 = vxor.u32 %v125, 2147483648
    %v132 = vxor.u32 %v129, 2147483648
    %v133 = vmul.f32 %v131, 1.442695
    %v134 = vpow.pop %v133
    %v135 = vmul.f32 %v132, 1.442695
    %v136 = vpow.pop %v135
    %v137 = vadd.f32 %v134, 1.0
    %v138 = vadd.f32 %v136, 1.0
    %v139 = vrcp.pop %v137
    %v140 = vmul.f32 1.0, %v139
    %v141 = vrcp.pop %v138
    %v142 = vmul.f32 1.0, %v141
    %v143 = vmul.f32 %v125, %v140
    %v144 = vmul.f32 %v129, %v142
    %v145 = vmul.f32 %v123, %v143
    %v146 = vmul.f32 %v127, %v144
    %v147 = vpack.c.bf16 %v146, %v145
    %v148 = vld [vmem:[#allocation2] sm:$0xff]
    %v149 = vld [vmem:[#allocation2 + $0x8] sm:$0xff]
    %v150 = vld [vmem:[%s3] sm:$0xf]
    %v151 = vld [vmem:[%s3 + $0x4] sm:$0xf]
    %v152 = vld [vmem:[%s3 + $0x8] sm:$0xf]
    %v153 = vld [vmem:[%s3 + $0xc] sm:$0xf]
    %v154 = vld [vmem:[%s3 + $0x10] sm:$0xf]
    %v155 = vld [vmem:[%s3 + $0x14] sm:$0xf]
    %v156 = vld [vmem:[%s3 + $0x18] sm:$0xf]
    %v157 = vld [vmem:[%s3 + $0x1c] sm:$0xf]
    %v158 = vld [vmem:[%s3 + $0x20] sm:$0xf]
    %v159 = vld [vmem:[%s3 + $0x24] sm:$0xf]
    %v160 = vld [vmem:[%s3 + $0x28] sm:$0xf]
    %v161 = vld [vmem:[%s3 + $0x2c] sm:$0xf]
    %v162 = vld [vmem:[%s3 + $0x30] sm:$0xf]
    %v163 = vld [vmem:[%s3 + $0x34] sm:$0xf]
    %v164 = vld [vmem:[%s3 + $0x38] sm:$0xf]
    %v165 = vld [vmem:[%s3 + $0x3c] sm:$0xf]
    %v182 = vunpack.c.l.b16 %v150
    %v183 = vunpack.c.l.b16 %v151
    %v184 = vunpack.c.l.b16 %v152
    %v185 = vunpack.c.l.b16 %v153
    %v186 = vunpack.c.l.b16 %v154
    %v187 = vunpack.c.l.b16 %v155
    %v188 = vunpack.c.l.b16 %v156
    %v189 = vunpack.c.l.b16 %v157
    %v190 = vunpack.c.l.b16 %v158
    %v191 = vunpack.c.l.b16 %v159
    %v192 = vunpack.c.l.b16 %v160
    %v193 = vunpack.c.l.b16 %v161
    %v194 = vunpack.c.l.b16 %v162
    %v195 = vunpack.c.l.b16 %v163
    %v196 = vunpack.c.l.b16 %v164
    %v197 = vunpack.c.l.b16 %v165
    %v198 = vpack.c.b16 %v183, %v182
    %v199 = vpack.c.b16 %v185, %v184
    %v200 = vpack.c.b16 %v187, %v186
    %v201 = vpack.c.b16 %v189, %v188
    %v202 = vpack.c.b16 %v191, %v190
    %v203 = vpack.c.b16 %v193, %v192
    %v204 = vpack.c.b16 %v195, %v194
    %v205 = vpack.c.b16 %v197, %v196
    %214 = vmatprep.subr.bf16.mxu0 0
    %215 = vmatpush1.bf16.msra.mxu0 %v198
    %216 = vmatprep.subr.bf16.mxu0 0
    %217 = vmatpush1.bf16.msra.mxu0 %v199
    %218 = vmatprep.subr.bf16.mxu0 0
    %219 = vmatpush1.bf16.msra.mxu0 %v200
    %220 = vmatprep.subr.bf16.mxu0 0
    %221 = vmatpush1.bf16.msra.mxu0 %v201
    %222 = vmatprep.subr.bf16.mxu0 0
    %223 = vmatpush1.bf16.msra.mxu0 %v202
    %224 = vmatprep.subr.bf16.mxu0 0
    %225 = vmatpush1.bf16.msra.mxu0 %v203
    %226 = vmatprep.subr.bf16.mxu0 0
    %227 = vmatpush1.bf16.msra.mxu0 %v204
    %228 = vmatprep.subr.bf16.mxu0 0
    %229 = vmatpush1.bf16.msra.mxu0 %v205
    %230 = vmatprep.subr.bf16.mxu0 0
    %231 = vmatpush1.bf16.msra.mxu0 0
    %232 = vmatprep.subr.bf16.mxu0 0
    %233 = vmatpush1.bf16.msra.mxu0 0
    %234 = vmatprep.subr.bf16.mxu0 0
    %235 = vmatpush1.bf16.msra.mxu0 0
    %236 = vmatprep.subr.bf16.mxu0 0
    %237 = vmatpush1.bf16.msra.mxu0 0
    %238 = vmatprep.subr.bf16.mxu0 0
    %239 = vmatpush1.bf16.msra.mxu0 0
    %240 = vmatprep.subr.bf16.mxu0 0
    %241 = vmatpush1.bf16.msra.mxu0 0
    %242 = vmatprep.subr.bf16.mxu0 0
    %243 = vmatpush1.bf16.msra.mxu0 0
    %244 = vmatprep.subr.bf16.mxu0 0
    %245 = vmatpush1.bf16.msra.mxu0 0
    %246 = vmatprep.mubr.bf16.mxu0 0
    %247 = vmatmul.mubr.bf16.gmra.mrb[0].mxu0 %v147
    %v248 = vpop.f32.mrb[0].mxu0
    %v249 = vadd.f32 0.0, %v248
    %v250 = vpop.f32.mrb[0].mxu0
    %v251 = vpop.f32.mrb[0].mxu0
    %v252 = vadd.f32 0.0, %v251
    %v253 = vpop.f32.mrb[0].mxu0
    %254 = vdwg.mxu0
    %v255 = vadd.f32 %v148, %v249
    %v256 = vadd.f32 %v149, %v252
    %257 = vst.msk [vmem:[#allocation2] sm:$0xff] %vm84, %v255
    %258 = vst.msk [vmem:[#allocation2 + $0x8] sm:$0xff] %vm84, %v256
    // Predicated region
    $region26: #{swiglu_ffn.1} parent=1 // pred_check
      %p259 = pneg %p22
    $region27: #{swiglu_ffn.1} parent=1 // pred_check_branch
      %261 = sbr.rel (%p259) target = $region29
    $region28: #{swiglu_ffn.1} parent=1 // pred_region
      %v262 = vld [vmem:[#allocation2] sm:$0xff]
      %v263 = vld [vmem:[#allocation2 + $0x8] sm:$0xff]
      %v264 = vld [vmem:[%s4] sm:$0x1]
      %v266 = vlaneseq
      %v267 = vshrl.u32 %v266, 7
      %v268 = vsub.s32 0, %v267
      %v269 = vrot.slane %v264, %v268
      %v271 = vadd.f32 %v262, %v269
      %v272 = vadd.f32 %v263, %v269
      %273 = vst.msk [vmem:[#allocation3] sm:$0xff] %vm84, %v271
      %274 = vst.msk [vmem:[#allocation3 + $0x8] sm:$0xff] %vm84, %v272
    $region29: #{swiglu_ffn.1} parent=1 // pred_fallthru
      _
    // Predicated region
    $region30: #{swiglu_ffn.1} parent=1 // pred_check
      _
    $region31: #{swiglu_ffn.1} parent=1 // pred_check_branch
      %276 = sbr.rel (0) target = $region33
    $region32: #{swiglu_ffn.1} parent=1 // pred_region
      %s278 = ssub.s32 256, 256
      %279 = vsyncadd [#allocation4], %s278
      %s280 = sshll.u32 [#allocation3], 4
      %s281 = int_to_ptr.vmem [resolvable:$true] %s280
      %286 = dma.vmem_to_hbm [thread:$0]  %s281, 256, %s5, [#allocation4], 128, 128, 8
    $region33: #{swiglu_ffn.1} parent=1 // pred_fallthru
      _
    // Predicated region
    $region34: #{swiglu_ffn.1} parent=1 // pred_check
      _
    $region35: #{swiglu_ffn.1} parent=1 // pred_check_branch
      %288 = sbr.rel (0) target = $region37
    $region36: #{swiglu_ffn.1} parent=1 // pred_region
      %289 = dma.done [#allocation4], 256
    $region37: #{swiglu_ffn.1} parent=1 // pred_fallthru
      _
    %290 = vsyncpa [#allocation4], 1

</llo_original>
